<compile_context>
chip_gen: v5e
topology: v5e:2x2
jax: 0.10.0
libtpu: 0.0.40
codegen_flags: <defaults>
</compile_context>

<pallas_src>
import jax
import jax.numpy as jnp
from jax.experimental import pallas as pl
from jax.experimental.pallas import tpu as pltpu

LANE = 128
SUBLANE = 8


def _round_up(n, m):
    return ((n + m - 1) // m) * m


def _pad_axis(x, target, axis):
    pad = target - x.shape[axis]
    if pad <= 0:
        return x
    widths = [(0, 0)] * x.ndim
    widths[axis] = (0, pad)
    return jnp.pad(x, widths)


# ----------------------------- Pallas kernel ------------------------------ #
def vqa_kernel(txt_ref, img_ref,
               w_txt_ref, b_txt_ref,
               w_img_ref, b_img_ref,
               w_cls_txt_ref, w_cls_img_ref, b_cls_ref,
               out_ref):
    # text branch: projection + ReLU (mean-pool done outside; 1/SEQ folded into W)
    txt_feat = jnp.dot(txt_ref[...], w_txt_ref[...],
                       preferred_element_type=jnp.float32) + b_txt_ref[...]
    txt_feat = jnp.maximum(txt_feat, 0.0)                     # (bt, D_txt_p)

    # visual branch: projection + ReLU (mean-pool done outside; 1/P folded into W)
    img_feat = jnp.dot(img_ref[...], w_img_ref[...],
                       preferred_element_type=jnp.float32) + b_img_ref[...]
    img_feat = jnp.maximum(img_feat, 0.0)                     # (bt, D_img_p)

    # classifier: split-weight accumulation == cat([txt, img], -1) @ W_cls + b
    out_ref[...] = (jnp.dot(txt_feat, w_cls_txt_ref[...],
                            preferred_element_type=jnp.float32)
                    + jnp.dot(img_feat, w_cls_img_ref[...],
                              preferred_element_type=jnp.float32)
                    + b_cls_ref[...])                         # (bt, NC_p)


# ------------------------------- wrapper ----------------------------------- #
def vqa_forward(txt_pooled, img_pooled,
                w_txt, b_txt, w_img, b_img,
                w_cls_txt, w_cls_img, b_cls,
                num_classes, *, block_b=128):
    """txt_pooled: (B, E) sum-pooled text embeddings.
       img_pooled: (B, C*p*p) sum-pooled patches.
       w_txt/w_img already carry the 1/SEQ and 1/P mean scales."""
    B, E = txt_pooled.shape
    PD = img_pooled.shape[1]

    # lane-pad feature / class dims; sublane-pad batch and pick a batch tile.
    d_txt_p = _round_up(w_txt.shape[1], LANE)
    d_img_p = _round_up(w_img.shape[1], LANE)
    nc_p = _round_up(num_classes, LANE)
    bt = min(block_b, _round_up(max(B, SUBLANE), SUBLANE))
    b_p = _round_up(B, bt)

    txt_pooled = _pad_axis(txt_pooled, b_p, 0)
    img_pooled = _pad_axis(img_pooled, b_p, 0)
    w_txt = _pad_axis(w_txt, d_txt_p, 1)
    b_txt = _pad_axis(b_txt, d_txt_p, 1)
    w_img = _pad_axis(w_img, d_img_p, 1)
    b_img = _pad_axis(b_img, d_img_p, 1)
    w_cls_txt = _pad_axis(_pad_axis(w_cls_txt, d_txt_p, 0), nc_p, 1)
    w_cls_img = _pad_axis(_pad_axis(w_cls_img, d_img_p, 0), nc_p, 1)
    b_cls = _pad_axis(b_cls, nc_p, 1)

    grid = (b_p // bt,)

    def batch_spec(feat):
        # batch-tiled input/output block
        return pl.BlockSpec((bt, feat), lambda i: (i, 0))

    def resident_spec(shape):
        # weights / biases: same block every grid step -> stay in VMEM
        return pl.BlockSpec(shape, lambda i: (0,) * len(shape))

    out_padded = pl.pallas_call(
        vqa_kernel,
        out_shape=jax.ShapeDtypeStruct((b_p, nc_p), jnp.float32),
        grid=grid,
        in_specs=[
            batch_spec(E),
            batch_spec(PD),
            resident_spec(w_txt.shape),
            resident_spec(b_txt.shape),
            resident_spec(w_img.shape),
            resident_spec(b_img.shape),
            resident_spec(w_cls_txt.shape),
            resident_spec(w_cls_img.shape),
            resident_spec(b_cls.shape),
        ],
        out_specs=batch_spec(nc_p),
        compiler_params=pltpu.CompilerParams(
            dimension_semantics=("parallel",),       # megacore-shard batch on v7x
            vmem_limit_bytes=64 * 1024 * 1024),      # sized for v7x 64 MiB VMEM
    )(txt_pooled, img_pooled, w_txt, b_txt, w_img, b_img,
      w_cls_txt, w_cls_img, b_cls)

    return out_padded[:B, :num_classes]


# ------------------------------- glue helpers ------------------------------ #
def image_to_patches(image_nchw, patch):
    """NCHW image -> (B, num_patches, C*patch*patch), C-major patch flattening."""
    B, C, H, W = image_nchw.shape
    hp, wp = H // patch, W // patch
    x = image_nchw.reshape(B, C, hp, patch, wp, patch)
    x = jnp.transpose(x, (0, 2, 4, 1, 3, 5))          # (B, hp, wp, C, p, p)
    return x.reshape(B, hp * wp, C * patch * patch)


# --------------------------------- main ------------------------------------ #
if __name__ == "__main__":
    # small shapes
    B, C, H, W = 2, 4, 16, 16
    PATCH = 8
    SEQ, VOCAB, E = 8, 64, 32
    D_TXT, D_IMG = 32, 32
    NUM_CLASSES = 16
    PATCH_DIM = C * PATCH * PATCH

    key = jax.random.PRNGKey(0)
    keys = jax.random.split(key, 10)

    # inputs (image NCHW like PyTorch; answer = integer token ids)
    image = jax.random.normal(keys[0], (B, C, H, W), dtype=jnp.float32)
    answer = jax.random.randint(keys[1], (B, SEQ), 0, VOCAB)

    # parameters
    embed_table = 0.02 * jax.random.normal(keys[2], (VOCAB, E), dtype=jnp.float32)
    w_txt = 0.05 * jax.random.normal(keys[3], (E, D_TXT), dtype=jnp.float32)
    b_txt = 0.05 * jax.random.normal(keys[4], (1, D_TXT), dtype=jnp.float32)
    w_img = 0.05 * jax.random.normal(keys[5], (PATCH_DIM, D_IMG), dtype=jnp.float32)
    b_img = 0.05 * jax.random.normal(keys[6], (1, D_IMG), dtype=jnp.float32)
    w_cls = 0.05 * jax.random.normal(keys[7], (D_TXT + D_IMG, NUM_CLASSES), dtype=jnp.float32)
    b_cls = 0.05 * jax.random.normal(keys[8], (1, NUM_CLASSES), dtype=jnp.float32)

    # glue: embedding lookup + patch extraction (data-dependent gather / reshape)
    txt_emb = jnp.take(embed_table, answer, axis=0)          # (B, SEQ, E)
    patches = image_to_patches(image, PATCH)                 # (B, P, PATCH_DIM)
    P = patches.shape[1]

    # parameter prep: fold the mean scales into the projection weights, pool as sums,
    # split the classifier weight so the kernel never concatenates along lanes.
    txt_pooled = jnp.sum(txt_emb, axis=1)                    # (B, E)
    img_pooled = jnp.sum(patches, axis=1)                    # (B, PATCH_DIM)
    w_txt_eff = w_txt * (1.0 / SEQ)
    w_img_eff = w_img * (1.0 / P)
    w_cls_txt = w_cls[:D_TXT, :]
    w_cls_img = w_cls[D_TXT:, :]

    out = vqa_forward(txt_pooled, img_pooled,
                      w_txt_eff, b_txt, w_img_eff, b_img,
                      w_cls_txt, w_cls_img, b_cls,
                      NUM_CLASSES)
    out = jax.block_until_ready(out)

    # pure-JAX reference with the original PyTorch semantics
    txt_feat_ref = jnp.maximum(jnp.mean(txt_emb, axis=1) @ w_txt + b_txt, 0.0)
    img_feat_ref = jnp.maximum(jnp.mean(patches, axis=1) @ w_img + b_img, 0.0)
    ref = jnp.concatenate([txt_feat_ref, img_feat_ref], axis=-1) @ w_cls + b_cls

    assert out.shape == (B, NUM_CLASSES)
    assert jnp.allclose(out, ref, atol=1e-4, rtol=1e-4), "mismatch vs reference"

    print("KERNEL_OK")
</pallas_src>

<mosaic_0001>
module attributes {stable_mosaic.version = 11 : i64} {
  func.func @vqa_kernel(%arg0: i32, %arg1: memref<8x32xf32, #tpu.memory_space<vmem>>, %arg2: memref<8x256xf32, #tpu.memory_space<vmem>>, %arg3: memref<32x128xf32, #tpu.memory_space<vmem>>, %arg4: memref<1x128xf32, #tpu.memory_space<vmem>>, %arg5: memref<256x128xf32, #tpu.memory_space<vmem>>, %arg6: memref<1x128xf32, #tpu.memory_space<vmem>>, %arg7: memref<128x128xf32, #tpu.memory_space<vmem>>, %arg8: memref<128x128xf32, #tpu.memory_space<vmem>>, %arg9: memref<1x128xf32, #tpu.memory_space<vmem>>, %arg10: memref<8x128xf32, #tpu.memory_space<vmem>>) attributes {dimension_semantics = [#tpu.dimension_semantics<parallel>], iteration_bounds = array<i64: 1>, scalar_prefetch = 0 : i64, scratch_operands = 0 : i64, tpu.core_type = #tpu.core_type<tc>, window_params = [{transform_indices = @transform_0, window_bounds = array<i64: 8, 32>}, {transform_indices = @transform_1, window_bounds = array<i64: 8, 256>}, {pipeline_mode = #tpu.pipeline_mode<synchronous>, transform_indices = @transform_2, window_bounds = array<i64: 32, 128>}, {pipeline_mode = #tpu.pipeline_mode<synchronous>, transform_indices = @transform_3, window_bounds = array<i64: 1, 128>}, {pipeline_mode = #tpu.pipeline_mode<synchronous>, transform_indices = @transform_4, window_bounds = array<i64: 256, 128>}, {pipeline_mode = #tpu.pipeline_mode<synchronous>, transform_indices = @transform_5, window_bounds = array<i64: 1, 128>}, {pipeline_mode = #tpu.pipeline_mode<synchronous>, transform_indices = @transform_6, window_bounds = array<i64: 128, 128>}, {pipeline_mode = #tpu.pipeline_mode<synchronous>, transform_indices = @transform_7, window_bounds = array<i64: 128, 128>}, {pipeline_mode = #tpu.pipeline_mode<synchronous>, transform_indices = @transform_8, window_bounds = array<i64: 1, 128>}, {transform_indices = @transform_9, window_bounds = array<i64: 8, 128>}]} {
    %c0 = arith.constant 0 : index
    %c0_0 = arith.constant 0 : index
    %0 = vector.load %arg1[%c0, %c0_0] : memref<8x32xf32, #tpu.memory_space<vmem>>, vector<8x32xf32>
    %c0_1 = arith.constant 0 : index
    %c0_2 = arith.constant 0 : index
    %1 = vector.load %arg3[%c0_1, %c0_2] : memref<32x128xf32, #tpu.memory_space<vmem>>, vector<32x128xf32>
    %cst = arith.constant dense<0.000000e+00> : vector<8x128xf32>
    %2 = tpu.matmul %0, %1, %cst {dimension_numbers = #tpu.dot_dimension_numbers<[1], [0], [0], [1], [0, 0, 1, 1], [], []>} : vector<8x32xf32>, vector<32x128xf32>, vector<8x128xf32> -> vector<8x128xf32>
    %c0_3 = arith.constant 0 : index
    %c0_4 = arith.constant 0 : index
    %3 = vector.load %arg4[%c0_3, %c0_4] : memref<1x128xf32, #tpu.memory_space<vmem>>, vector<1x128xf32>
    %4 = vector.broadcast %3 : vector<1x128xf32> to vector<8x128xf32>
    %5 = arith.addf %2, %4 : vector<8x128xf32>
    %cst_5 = arith.constant 0.000000e+00 : f32
    %6 = vector.broadcast %cst_5 : f32 to vector<8x128xf32>
    %7 = arith.maximumf %5, %6 : vector<8x128xf32>
    %c0_6 = arith.constant 0 : index
    %c0_7 = arith.constant 0 : index
    %8 = vector.load %arg2[%c0_6, %c0_7] : memref<8x256xf32, #tpu.memory_space<vmem>>, vector<8x256xf32>
    %c0_8 = arith.constant 0 : index
    %c0_9 = arith.constant 0 : index
    %9 = vector.load %arg5[%c0_8, %c0_9] : memref<256x128xf32, #tpu.memory_space<vmem>>, vector<256x128xf32>
    %cst_10 = arith.constant dense<0.000000e+00> : vector<8x128xf32>
    %10 = tpu.matmul %8, %9, %cst_10 {dimension_numbers = #tpu.dot_dimension_numbers<[1], [0], [0], [1], [0, 0, 1, 1], [], []>} : vector<8x256xf32>, vector<256x128xf32>, vector<8x128xf32> -> vector<8x128xf32>
    %c0_11 = arith.constant 0 : index
    %c0_12 = arith.constant 0 : index
    %11 = vector.load %arg6[%c0_11, %c0_12] : memref<1x128xf32, #tpu.memory_space<vmem>>, vector<1x128xf32>
    %12 = vector.broadcast %11 : vector<1x128xf32> to vector<8x128xf32>
    %13 = arith.addf %10, %12 : vector<8x128xf32>
    %cst_13 = arith.constant 0.000000e+00 : f32
    %14 = vector.broadcast %cst_13 : f32 to vector<8x128xf32>
    %15 = arith.maximumf %13, %14 : vector<8x128xf32>
    %c0_14 = arith.constant 0 : index
    %c0_15 = arith.constant 0 : index
    %16 = vector.load %arg7[%c0_14, %c0_15] : memref<128x128xf32, #tpu.memory_space<vmem>>, vector<128x128xf32>
    %cst_16 = arith.constant dense<0.000000e+00> : vector<8x128xf32>
    %17 = tpu.matmul %7, %16, %cst_16 {dimension_numbers = #tpu.dot_dimension_numbers<[1], [0], [0], [1], [0, 0, 1, 1], [], []>} : vector<8x128xf32>, vector<128x128xf32>, vector<8x128xf32> -> vector<8x128xf32>
    %c0_17 = arith.constant 0 : index
    %c0_18 = arith.constant 0 : index
    %18 = vector.load %arg8[%c0_17, %c0_18] : memref<128x128xf32, #tpu.memory_space<vmem>>, vector<128x128xf32>
    %cst_19 = arith.constant dense<0.000000e+00> : vector<8x128xf32>
    %19 = tpu.matmul %15, %18, %cst_19 {dimension_numbers = #tpu.dot_dimension_numbers<[1], [0], [0], [1], [0, 0, 1, 1], [], []>} : vector<8x128xf32>, vector<128x128xf32>, vector<8x128xf32> -> vector<8x128xf32>
    %20 = arith.addf %17, %19 : vector<8x128xf32>
    %c0_20 = arith.constant 0 : index
    %c0_21 = arith.constant 0 : index
    %21 = vector.load %arg9[%c0_20, %c0_21] : memref<1x128xf32, #tpu.memory_space<vmem>>, vector<1x128xf32>
    %22 = vector.broadcast %21 : vector<1x128xf32> to vector<8x128xf32>
    %23 = arith.addf %20, %22 : vector<8x128xf32>
    %c0_22 = arith.constant 0 : index
    %c0_23 = arith.constant 0 : index
    %24 = vector.load %arg10[%c0_22, %c0_23] : memref<8x128xf32, #tpu.memory_space<vmem>>, vector<8x128xf32>
    tpu.vector_store %arg10[%c0_22, %c0_23], %23 {strides = array<i32>} : memref<8x128xf32, #tpu.memory_space<vmem>>, vector<8x128xf32>,
    return
  }
  func.func @transform_0(%arg0: i32) -> (i32, i32) {
    %c0_i32 = arith.constant 0 : i32
    %c0_i32_0 = arith.constant 0 : i32
    return %arg0, %c0_i32 : i32, i32
  }
  func.func @transform_1(%arg0: i32) -> (i32, i32) {
    %c0_i32 = arith.constant 0 : i32
    %c0_i32_0 = arith.constant 0 : i32
    return %arg0, %c0_i32 : i32, i32
  }
  func.func @transform_2(%arg0: i32) -> (i32, i32) {
    %c0_i32 = arith.constant 0 : i32
    %c0_i32_0 = arith.constant 0 : i32
    %c0_i32_1 = arith.constant 0 : i32
    return %c0_i32, %c0_i32_0 : i32, i32
  }
  func.func @transform_3(%arg0: i32) -> (i32, i32) {
    %c0_i32 = arith.constant 0 : i32
    %c0_i32_0 = arith.constant 0 : i32
    %c0_i32_1 = arith.constant 0 : i32
    return %c0_i32, %c0_i32_0 : i32, i32
  }
  func.func @transform_4(%arg0: i32) -> (i32, i32) {
    %c0_i32 = arith.constant 0 : i32
    %c0_i32_0 = arith.constant 0 : i32
    %c0_i32_1 = arith.constant 0 : i32
    return %c0_i32, %c0_i32_0 : i32, i32
  }
  func.func @transform_5(%arg0: i32) -> (i32, i32) {
    %c0_i32 = arith.constant 0 : i32
    %c0_i32_0 = arith.constant 0 : i32
    %c0_i32_1 = arith.constant 0 : i32
    return %c0_i32, %c0_i32_0 : i32, i32
  }
  func.func @transform_6(%arg0: i32) -> (i32, i32) {
    %c0_i32 = arith.constant 0 : i32
    %c0_i32_0 = arith.constant 0 : i32
    %c0_i32_1 = arith.constant 0 : i32
    return %c0_i32, %c0_i32_0 : i32, i32
  }
  func.func @transform_7(%arg0: i32) -> (i32, i32) {
    %c0_i32 = arith.constant 0 : i32
    %c0_i32_0 = arith.constant 0 : i32
    %c0_i32_1 = arith.constant 0 : i32
    return %c0_i32, %c0_i32_0 : i32, i32
  }
  func.func @transform_8(%arg0: i32) -> (i32, i32) {
    %c0_i32 = arith.constant 0 : i32
    %c0_i32_0 = arith.constant 0 : i32
    %c0_i32_1 = arith.constant 0 : i32
    return %c0_i32, %c0_i32_0 : i32, i32
  }
  func.func @transform_9(%arg0: i32) -> (i32, i32) {
    %c0_i32 = arith.constant 0 : i32
    %c0_i32_0 = arith.constant 0 : i32
    return %arg0, %c0_i32 : i32, i32
  }
}

</mosaic_0001>

<llo_original>
// kernel: tpu_custom_call.1
$region0: #{tpu_custom_call.1}
  #allocation0 [shape = 'u32[]', space=smem, size = 0x4, offset = 0x4, fixed_abs, tag = 'smem constant byte address 0x4 - core index']
  #allocation1 [shape = 'u32[72,128]{1,0:T(1,128)}', space=vmem, size = 0x9000, scoped, tag = 'internal scratch']
  %s0 = inlined_call_operand.hbm [shape: f32[8,32], index: 0, kind: input, shape index: {}]
  %s1 = inlined_call_operand.hbm [shape: f32[8,256], index: 1, kind: input, shape index: {}]
  %s2 = inlined_call_operand.hbm [shape: f32[32,128], index: 2, kind: input, shape index: {}]
  %s3 = inlined_call_operand.vmem [shape: f32[1,128], index: 3, kind: input, shape index: {}]
  %s4 = inlined_call_operand.hbm [shape: f32[256,128], index: 4, kind: input, shape index: {}]
  %s5 = inlined_call_operand.vmem [shape: f32[1,128], index: 5, kind: input, shape index: {}]
  %s6 = inlined_call_operand.hbm [shape: f32[128,128], index: 6, kind: input, shape index: {}]
  %s7 = inlined_call_operand.hbm [shape: f32[128,128], index: 7, kind: input, shape index: {}]
  %s8 = inlined_call_operand.vmem [shape: f32[1,128], index: 8, kind: input, shape index: {}]
  %s9 = inlined_call_operand.hbm [shape: f32[8,128], index: 9, kind: output, shape index: {}]
  %s10 = sld [smem:[#allocation0]]
  $region70: #{tpu_custom_call.1} parent=0
    _
  %s12 = ssub.s32 1, %s10
  %s13 = scalar_select 0, %s12, %s10
  $region1: #{tpu_custom_call.1} parent=0
    #allocation2 [shape = 'u8[4096]{0}', space=vmem, size = 0x1000, scoped, tag = 'input window, operand 0, single buffered']
    #allocation3 [shape = 's32[1]{0}', space=sflag, size = 0x4, scoped, tag = 'scoped memory for tpu_custom_call.1']
    #allocation4 [shape = 's32[1]{0}', space=sflag, size = 0x4, scoped, tag = 'scoped memory for tpu_custom_call.1']
    #allocation5 [shape = 'u8[8192]{0}', space=vmem, size = 0x2000, scoped, tag = 'input window, operand 1, single buffered']
    #allocation6 [shape = 's32[1]{0}', space=sflag, size = 0x4, scoped, tag = 'scoped memory for tpu_custom_call.1']
    #allocation7 [shape = 'u8[16384]{0}', space=vmem, size = 0x4000, scoped, tag = 'input window, operand 2, single buffered']
    #allocation8 [shape = 'u8[131072]{0}', space=vmem, size = 0x20000, scoped, tag = 'input window, operand 4, single buffered']
    #allocation9 [shape = 's32[1]{0}', space=sflag, size = 0x4, scoped, tag = 'scoped memory for tpu_custom_call.1']
    #allocation10 [shape = 'u8[65536]{0}', space=vmem, size = 0x10000, scoped, tag = 'input window, operand 6, single buffered']
    #allocation11 [shape = 'u8[65536]{0}', space=vmem, size = 0x10000, scoped, tag = 'input window, operand 7, single buffered']
    #allocation12 [shape = 's32[1]{0}', space=sflag, size = 0x4, scoped, tag = 'scoped memory for tpu_custom_call.1']
    #allocation13 [shape = 'u8[4096]{0}', space=vmem, size = 0x1000, scoped, tag = 'output window, operand 0, single buffered']
    %14 = vsyncpa [#allocation3], 0
    %15 = vsyncpa [#allocation6], 0
    %16 = vsyncpa [#allocation9], 0
    %17 = vsyncpa [#allocation12], 0
    %18 = vsyncpa [#allocation4], 0
    // Predicated region
    $region2: #{tpu_custom_call.1} parent=1 // pred_check
      _
    $region3: #{tpu_custom_call.1} parent=1 // pred_check_branch
      %20 = sbr.rel (0) target = $region5
    $region4: #{tpu_custom_call.1} parent=1 // pred_region
      %22 = vsyncadd [#allocation3], 0
      %s24 = sshll.u32 %s0, 4
      %s25 = int_to_ptr.hbm [resolvable:$true] %s24
      %s26 = sshll.u32 [#allocation2], 4
      %s27 = int_to_ptr.vmem [resolvable:$true] %s26
      %29 = dma.hbm_to_vmem [thread:$0]  %s25, 128, %s27, [#allocation3]
    $region5: #{tpu_custom_call.1} parent=1 // pred_fallthru
      _
    // Predicated region
    $region6: #{tpu_custom_call.1} parent=1 // pred_check
      _
    $region7: #{tpu_custom_call.1} parent=1 // pred_check_branch
      %31 = sbr.rel (0) target = $region9
    $region8: #{tpu_custom_call.1} parent=1 // pred_region
      %33 = vsyncadd [#allocation6], 0
      %s35 = sshll.u32 %s1, 4
      %s36 = int_to_ptr.hbm [resolvable:$true] %s35
      %s37 = sshll.u32 [#allocation5], 4
      %s38 = int_to_ptr.vmem [resolvable:$true] %s37
      %40 = dma.hbm_to_vmem [thread:$0]  %s36, 256, %s38, [#allocation6]
    $region9: #{tpu_custom_call.1} parent=1 // pred_fallthru
      _
    // Predicated region
    $region10: #{tpu_custom_call.1} parent=1 // pred_check
      _
    $region11: #{tpu_custom_call.1} parent=1 // pred_check_branch
      %42 = sbr.rel (0) target = $region13
    $region12: #{tpu_custom_call.1} parent=1 // pred_region
      %44 = vsyncadd [#allocation6], 0
      %s45 = sshll.u32 %s2, 4
      %s46 = int_to_ptr.hbm [resolvable:$true] %s45
      %s47 = sshll.u32 [#allocation7], 4
      %s48 = int_to_ptr.vmem [resolvable:$true] %s47
      %53 = dma.hbm_to_vmem [thread:$0]  %s46, 512, %s48, [#allocation6], 128, 128, 8
    $region13: #{tpu_custom_call.1} parent=1 // pred_fallthru
      _
    // Predicated region
    $region14: #{tpu_custom_call.1} parent=1 // pred_check
      _
    $region15: #{tpu_custom_call.1} parent=1 // pred_check_branch
      %55 = sbr.rel (0) target = $region17
    $region16: #{tpu_custom_call.1} parent=1 // pred_region
      _
    $region17: #{tpu_custom_call.1} parent=1 // pred_fallthru
      _
    // Predicated region
    $region18: #{tpu_custom_call.1} parent=1 // pred_check
      _
    $region19: #{tpu_custom_call.1} parent=1 // pred_check_branch
      %57 = sbr.rel (0) target = $region21
    $region20: #{tpu_custom_call.1} parent=1 // pred_region
      %59 = vsyncadd [#allocation9], 0
      %s60 = sshll.u32 %s4, 4
      %s61 = int_to_ptr.hbm [resolvable:$true] %s60
      %s62 = sshll.u32 [#allocation8], 4
      %s63 = int_to_ptr.vmem [resolvable:$true] %s62
      %68 = dma.hbm_to_vmem [thread:$0]  %s61, 4096, %s63, [#allocation9], 128, 128, 8
    $region21: #{tpu_custom_call.1} parent=1 // pred_fallthru
      _
    // Predicated region
    $region22: #{tpu_custom_call.1} parent=1 // pred_check
      _
    $region23: #{tpu_custom_call.1} parent=1 // pred_check_branch
      %70 = sbr.rel (0) target = $region25
    $region24: #{tpu_custom_call.1} parent=1 // pred_region
      _
    $region25: #{tpu_custom_call.1} parent=1 // pred_fallthru
      _
    // Predicated region
    $region26: #{tpu_custom_call.1} parent=1 // pred_check
      _
    $region27: #{tpu_custom_call.1} parent=1 // pred_check_branch
      %72 = sbr.rel (0) target = $region29
    $region28: #{tpu_custom_call.1} parent=1 // pred_region
      %74 = vsyncadd [#allocation9], 0
      %s75 = sshll.u32 %s6, 4
      %s76 = int_to_ptr.hbm [resolvable:$true] %s75
      %s77 = sshll.u32 [#allocation10], 4
      %s78 = int_to_ptr.vmem [resolvable:$true] %s77
      %83 = dma.hbm_to_vmem [thread:$0]  %s76, 2048, %s78, [#allocation9], 128, 128, 8
    $region29: #{tpu_custom_call.1} parent=1 // pred_fallthru
      _
    // Predicated region
    $region30: #{tpu_custom_call.1} parent=1 // pred_check
      _
    $region31: #{tpu_custom_call.1} parent=1 // pred_check_branch
      %85 = sbr.rel (0) target = $region33
    $region32: #{tpu_custom_call.1} parent=1 // pred_region
      %87 = vsyncadd [#allocation12], 0
      %s88 = sshll.u32 %s7, 4
      %s89 = int_to_ptr.hbm [resolvable:$true] %s88
      %s90 = sshll.u32 [#allocation11], 4
      %s91 = int_to_ptr.vmem [resolvable:$true] %s90
      %96 = dma.hbm_to_vmem [thread:$0]  %s89, 2048, %s91, [#allocation12], 128, 128, 8
    $region33: #{tpu_custom_call.1} parent=1 // pred_fallthru
      _
    // Predicated region
    $region34: #{tpu_custom_call.1} parent=1 // pred_check
      _
    $region35: #{tpu_custom_call.1} parent=1 // pred_check_branch
      %98 = sbr.rel (0) target = $region37
    $region36: #{tpu_custom_call.1} parent=1 // pred_region
      _
    $region37: #{tpu_custom_call.1} parent=1 // pred_fallthru
      _
    // Predicated region
    $region38: #{tpu_custom_call.1} parent=1 // pred_check
      _
    $region39: #{tpu_custom_call.1} parent=1 // pred_check_branch
      %100 = sbr.rel (0) target = $region41
    $region40: #{tpu_custom_call.1} parent=1 // pred_region
      %102 = dma.done [#allocation3], 128
    $region41: #{tpu_custom_call.1} parent=1 // pred_fallthru
      _
    // Predicated region
    $region42: #{tpu_custom_call.1} parent=1 // pred_check
      _
    $region43: #{tpu_custom_call.1} parent=1 // pred_check_branch
      %104 = sbr.rel (0) target = $region45
    $region44: #{tpu_custom_call.1} parent=1 // pred_region
      %106 = dma.done [#allocation6], 256
    $region45: #{tpu_custom_call.1} parent=1 // pred_fallthru
      _
    // Predicated region
    $region46: #{tpu_custom_call.1} parent=1 // pred_check
      _
    $region47: #{tpu_custom_call.1} parent=1 // pred_check_branch
      %108 = sbr.rel (0) target = $region49
    $region48: #{tpu_custom_call.1} parent=1 // pred_region
      %110 = dma.done [#allocation6], 512
    $region49: #{tpu_custom_call.1} parent=1 // pred_fallthru
      _
    // Predicated region
    $region50: #{tpu_custom_call.1} parent=1 // pred_check
      _
    $region51: #{tpu_custom_call.1} parent=1 // pred_check_branch
      %112 = sbr.rel (0) target = $region53
    $region52: #{tpu_custom_call.1} parent=1 // pred_region
      %114 = dma.done [#allocation9], 4096
    $region53: #{tpu_custom_call.1} parent=1 // pred_fallthru
      _
    // Predicated region
    $region54: #{tpu_custom_call.1} parent=1 // pred_check
      _
    $region55: #{tpu_custom_call.1} parent=1 // pred_check_branch
      %116 = sbr.rel (0) target = $region57
    $region56: #{tpu_custom_call.1} parent=1 // pred_region
      %118 = dma.done [#allocation9], 2048
    $region57: #{tpu_custom_call.1} parent=1 // pred_fallthru
      _
    // Predicated region
    $region58: #{tpu_custom_call.1} parent=1 // pred_check
      _
    $region59: #{tpu_custom_call.1} parent=1 // pred_check_branch
      %120 = sbr.rel (0) target = $region61
    $region60: #{tpu_custom_call.1} parent=1 // pred_region
      %122 = dma.done [#allocation12], 2048
    $region61: #{tpu_custom_call.1} parent=1 // pred_fallthru
      _
    %v123 = vld [vmem:[#allocation2] sm:$0xff]
    %v124 = vld [vmem:[#allocation7] sm:$0xff]
    %v125 = vld [vmem:[#allocation7 + $0x8] sm:$0xff]
    %v126 = vld [vmem:[#allocation7 + $0x10] sm:$0xff]
    %v127 = vld [vmem:[#allocation7 + $0x18] sm:$0xff]
    %v128 = vld [vmem:[%s3] sm:$0x1]
    %v130 = vperm.slane %v128, 0
    %vm132 = vcmask 261120
    %v134 = vsel %vm132, %v123, 0
    %136 = vmatpush.msra.mxu0 0.0
    %137 = vmatpush.msra.mxu0 0.0
    %138 = vmatpush.msra.mxu0 0.0
    %139 = vmatpush.msra.mxu0 0.0
    %140 = vmatpush.msra.mxu0 0.0
    %141 = vmatpush.msra.mxu0 0.0
    %142 = vmatpush.msra.mxu0 0.0
    %143 = vmatpush.msra.mxu0 0.0
    %144 = vmatpush.msra.mxu0 0.0
    %145 = vmatpush.msra.mxu0 0.0
    %146 = vmatpush.msra.mxu0 0.0
    %147 = vmatpush.msra.mxu0 0.0
    %148 = vmatpush.msra.mxu0 %v127
    %149 = vmatpush.msra.mxu0 %v126
    %150 = vmatpush.msra.mxu0 %v125
    %151 = vmatpush.msra.mxu0 %v124
    %152 = vmatmul.f32.gmra.mxu0 %v134
    %v153 = vpop.f32.mrf.mxu0
    %v154 = vadd.f32 %v130, %v153
    %155 = vdwg.mxu0
    %v156 = vmax.f32 %v154, 0.0
    %v157 = vld [vmem:[#allocation5] sm:$0xff]
    %v158 = vld [vmem:[#allocation5 + $0x8] sm:$0xff]
    %v159 = vld [vmem:[#allocation8] sm:$0xff]
    %v160 = vld [vmem:[#allocation8 + $0x8] sm:$0xff]
    %v161 = vld [vmem:[#allocation8 + $0x10] sm:$0xff]
    %v162 = vld [vmem:[#allocation8 + $0x18] sm:$0xff]
    %v163 = vld [vmem:[#allocation8 + $0x20] sm:$0xff]
    %v164 = vld [vmem:[#allocation8 + $0x28] sm:$0xff]
    %v165 = vld [vmem:[#allocation8 + $0x30] sm:$0xff]
    %v166 = vld [vmem:[#allocation8 + $0x38] sm:$0xff]
    %v167 = vld [vmem:[#allocation8 + $0x40] sm:$0xff]
    %v168 = vld [vmem:[#allocation8 + $0x48] sm:$0xff]
    %v169 = vld [vmem:[#allocation8 + $0x50] sm:$0xff]
    %v170 = vld [vmem:[#allocation8 + $0x58] sm:$0xff]
    %v171 = vld [vmem:[#allocation8 + $0x60] sm:$0xff]
    %v172 = vld [vmem:[#allocation8 + $0x68] sm:$0xff]
    %v173 = vld [vmem:[#allocation8 + $0x70] sm:$0xff]
    %v174 = vld [vmem:[#allocation8 + $0x78] sm:$0xff]
    %v175 = vld [vmem:[#allocation8 + $0x80] sm:$0xff]
    %v176 = vld [vmem:[#allocation8 + $0x88] sm:$0xff]
    %v177 = vld [vmem:[#allocation8 + $0x90] sm:$0xff]
    %v178 = vld [vmem:[#allocation8 + $0x98] sm:$0xff]
    %v179 = vld [vmem:[#allocation8 + $0xa0] sm:$0xff]
    %v180 = vld [vmem:[#allocation8 + $0xa8] sm:$0xff]
    %v181 = vld [vmem:[#allocation8 + $0xb0] sm:$0xff]
    %v182 = vld [vmem:[#allocation8 + $0xb8] sm:$0xff]
    %v183 = vld [vmem:[#allocation8 + $0xc0] sm:$0xff]
    %v184 = vld [vmem:[#allocation8 + $0xc8] sm:$0xff]
    %v185 = vld [vmem:[#allocation8 + $0xd0] sm:$0xff]
    %v186 = vld [vmem:[#allocation8 + $0xd8] sm:$0xff]
    %v187 = vld [vmem:[#allocation8 + $0xe0] sm:$0xff]
    %v188 = vld [vmem:[#allocation8 + $0xe8] sm:$0xff]
    %v189 = vld [vmem:[#allocation8 + $0xf0] sm:$0xff]
    %v190 = vld [vmem:[#allocation8 + $0xf8] sm:$0xff]
    %v191 = vld [vmem:[%s5] sm:$0x1]
    %v193 = vperm.slane %v191, 0
    %195 = vmatpush.msra.mxu0 %v174
    %196 = vmatpush.msra.mxu0 %v173
    %197 = vmatpush.msra.mxu0 %v172
    %198 = vmatpush.msra.mxu0 %v171
    %199 = vmatpush.msra.mxu0 %v170
    %200 = vmatpush.msra.mxu0 %v169
    %201 = vmatpush.msra.mxu0 %v168
    %202 = vmatpush.msra.mxu0 %v167
    %203 = vmatpush.msra.mxu0 %v166
    %204 = vmatpush.msra.mxu0 %v165
    %205 = vmatpush.msra.mxu0 %v164
    %206 = vmatpush.msra.mxu0 %v163
    %207 = vmatpush.msra.mxu0 %v162
    %208 = vmatpush.msra.mxu0 %v161
    %209 = vmatpush.msra.mxu0 %v160
    %210 = vmatpush.msra.mxu0 %v159
    %211 = vmatmul.f32.gmra.mxu0 %v157
    %v212 = vpop.f32.mrf.mxu0
    %v213 = vadd.f32 %v193, %v212
    %214 = vdwg.mxu0
    %215 = vmatpush.msra.mxu0 %v190
    %216 = vmatpush.msra.mxu0 %v189
    %217 = vmatpush.msra.mxu0 %v188
    %218 = vmatpush.msra.mxu0 %v187
    %219 = vmatpush.msra.mxu0 %v186
    %220 = vmatpush.msra.mxu0 %v185
    %221 = vmatpush.msra.mxu0 %v184
    %222 = vmatpush.msra.mxu0 %v183
    %223 = vmatpush.msra.mxu0 %v182
    %224 = vmatpush.msra.mxu0 %v181
    %225 = vmatpush.msra.mxu0 %v180
    %226 = vmatpush.msra.mxu0 %v179
    %227 = vmatpush.msra.mxu0 %v178
    %228 = vmatpush.msra.mxu0 %v177
    %229 = vmatpush.msra.mxu0 %v176
    %230 = vmatpush.msra.mxu0 %v175
    %231 = vmatmul.f32.gmra.mxu0 %v158
    %v232 = vpop.f32.mrf.mxu0
    %v233 = vadd.f32 %v213, %v232
    %234 = vdwg.mxu0
    %v235 = vmax.f32 %v233, 0.0
    %v236 = vld [vmem:[#allocation10] sm:$0xff]
    %v237 = vld [vmem:[#allocation10 + $0x8] sm:$0xff]
    %v238 = vld [vmem:[#allocation10 + $0x10] sm:$0xff]
    %v239 = vld [vmem:[#allocation10 + $0x18] sm:$0xff]
    %v240 = vld [vmem:[#allocation10 + $0x20] sm:$0xff]
    %v241 = vld [vmem:[#allocation10 + $0x28] sm:$0xff]
    %v242 = vld [vmem:[#allocation10 + $0x30] sm:$0xff]
    %v243 = vld [vmem:[#allocation10 + $0x38] sm:$0xff]
    %v244 = vld [vmem:[#allocation10 + $0x40] sm:$0xff]
    %v245 = vld [vmem:[#allocation10 + $0x48] sm:$0xff]
    %v246 = vld [vmem:[#allocation10 + $0x50] sm:$0xff]
    %v247 = vld [vmem:[#allocation10 + $0x58] sm:$0xff]
    %v248 = vld [vmem:[#allocation10 + $0x60] sm:$0xff]
    %v249 = vld [vmem:[#allocation10 + $0x68] sm:$0xff]
    %v250 = vld [vmem:[#allocation10 + $0x70] sm:$0xff]
    %v251 = vld [vmem:[#allocation10 + $0x78] sm:$0xff]
    %v252 = vld [vmem:[#allocation11] sm:$0xff]
    %v253 = vld [vmem:[#allocation11 + $0x8] sm:$0xff]
    %v254 = vld [vmem:[#allocation11 + $0x10] sm:$0xff]
    %v255 = vld [vmem:[#allocation11 + $0x18] sm:$0xff]
    %v256 = vld [vmem:[#allocation11 + $0x20] sm:$0xff]
    %v257 = vld [vmem:[#allocation11 + $0x28] sm:$0xff]
    %v258 = vld [vmem:[#allocation11 + $0x30] sm:$0xff]
    %v259 = vld [vmem:[#allocation11 + $0x38] sm:$0xff]
    %v260 = vld [vmem:[#allocation11 + $0x40] sm:$0xff]
    %v261 = vld [vmem:[#allocation11 + $0x48] sm:$0xff]
    %v262 = vld [vmem:[#allocation11 + $0x50] sm:$0xff]
    %v263 = vld [vmem:[#allocation11 + $0x58] sm:$0xff]
    %v264 = vld [vmem:[#allocation11 + $0x60] sm:$0xff]
    %v265 = vld [vmem:[#allocation11 + $0x68] sm:$0xff]
    %v266 = vld [vmem:[#allocation11 + $0x70] sm:$0xff]
    %v267 = vld [vmem:[#allocation11 + $0x78] sm:$0xff]
    %268 = vmatpush.msra.mxu0 %v267
    %269 = vmatpush.msra.mxu0 %v266
    %270 = vmatpush.msra.mxu0 %v265
    %271 = vmatpush.msra.mxu0 %v264
    %272 = vmatpush.msra.mxu0 %v263
    %273 = vmatpush.msra.mxu0 %v262
    %274 = vmatpush.msra.mxu0 %v261
    %275 = vmatpush.msra.mxu0 %v260
    %276 = vmatpush.msra.mxu0 %v259
    %277 = vmatpush.msra.mxu0 %v258
    %278 = vmatpush.msra.mxu0 %v257
    %279 = vmatpush.msra.mxu0 %v256
    %280 = vmatpush.msra.mxu0 %v255
    %281 = vmatpush.msra.mxu0 %v254
    %282 = vmatpush.msra.mxu0 %v253
    %283 = vmatpush.msra.mxu0 %v252
    %284 = vmatmul.f32.gmra.mxu0 %v235
    %v285 = vpop.f32.mrf.mxu0
    %v286 = vadd.f32 0.0, %v285
    %287 = vdwg.mxu0
    %288 = vmatpush.msra.mxu0 %v251
    %289 = vmatpush.msra.mxu0 %v250
    %290 = vmatpush.msra.mxu0 %v249
    %291 = vmatpush.msra.mxu0 %v248
    %292 = vmatpush.msra.mxu0 %v247
    %293 = vmatpush.msra.mxu0 %v246
    %294 = vmatpush.msra.mxu0 %v245
    %295 = vmatpush.msra.mxu0 %v244
    %296 = vmatpush.msra.mxu0 %v243
    %297 = vmatpush.msra.mxu0 %v242
    %298 = vmatpush.msra.mxu0 %v241
    %299 = vmatpush.msra.mxu0 %v240
    %300 = vmatpush.msra.mxu0 %v239
    %301 = vmatpush.msra.mxu0 %v238
    %302 = vmatpush.msra.mxu0 %v237
    %303 = vmatpush.msra.mxu0 %v236
    %304 = vmatmul.f32.gmra.mxu0 %v156
    %v305 = vpop.f32.mrf.mxu0
    %v306 = vadd.f32 %v286, %v305
    %307 = vdwg.mxu0
    %v308 = vld [vmem:[%s8] sm:$0x1]
    %v310 = vperm.slane %v308, 0
    %v312 = vadd.f32 %v306, %v310
    %313 = vst [vmem:[#allocation13] sm:$0xff] %v312
    // Predicated region
    $region62: #{tpu_custom_call.1} parent=1 // pred_check
      _
    $region63: #{tpu_custom_call.1} parent=1 // pred_check_branch
      %315 = sbr.rel (0) target = $region65
    $region64: #{tpu_custom_call.1} parent=1 // pred_region
      %317 = vsyncadd [#allocation4], 0
      %s319 = sshll.u32 [#allocation13], 4
      %s320 = int_to_ptr.vmem [resolvable:$true] %s319
      %s321 = sshll.u32 %s9, 4
      %s322 = int_to_ptr.hbm [resolvable:$true] %s321
      %324 = dma.vmem_to_hbm [thread:$0]  %s320, 128, %s322, [#allocation4]
    $region65: #{tpu_custom_call.1} parent=1 // pred_fallthru
      _
    // Predicated region
    $region66: #{tpu_custom_call.1} parent=1 // pred_check
      _
    $region67: #{tpu_custom_call.1} parent=1 // pred_check_branch
      %326 = sbr.rel (0) target = $region69
    $region68: #{tpu_custom_call.1} parent=1 // pred_region
      %328 = dma.done [#allocation4], 128
    $region69: #{tpu_custom_call.1} parent=1 // pred_fallthru
      _
    %329 = vsyncpa [#allocation3], 1
    %330 = vsyncpa [#allocation6], 1
    %331 = vsyncpa [#allocation9], 1
    %332 = vsyncpa [#allocation12], 1
    %333 = vsyncpa [#allocation4], 1

</llo_original>
